<compile_context>
chip_gen: v7x
topology: tpu7x:2x2x1
jax: 0.10.0
libtpu: 0.0.40
codegen_flags: <defaults>
</compile_context>

<pallas_src>
from functools import partial

import jax
import jax.numpy as jnp
from jax.experimental import pallas as pl
from jax.experimental.pallas import tpu as pltpu

# Logical sizes (PyTorch module) and padded (TPU-aligned) sizes.
F_IN, H1, H2, H3, OUT = 6, 100, 50, 20, 1
F_PAD, H1_PAD, H2_PAD, H3_PAD, OUT_PAD = 8, 128, 128, 128, 128


def _round_up(n, m):
    return ((n + m - 1) // m) * m


def _mlp_kernel(x_ref, w1_ref, w2_ref, w3_ref, w4_ref, b_ref, out_ref):
    """One batch tile of the fused 4-layer MLP. bf16 MXU inputs, f32 accumulate/activations."""
    x = x_ref[...]          # (TB, 8)   bf16
    b = b_ref[...]          # (8, 128)  f32, rows 0..3 = b1..b4 (zero padded)

    h = jnp.dot(x, w1_ref[...], preferred_element_type=jnp.float32)
    h = jnp.maximum(h + b[0:1, :], 0.0)

    h = jnp.dot(h.astype(jnp.bfloat16), w2_ref[...], preferred_element_type=jnp.float32)
    h = jnp.maximum(h + b[1:2, :], 0.0)

    h = jnp.dot(h.astype(jnp.bfloat16), w3_ref[...], preferred_element_type=jnp.float32)
    h = jnp.maximum(h + b[2:3, :], 0.0)

    logits = jnp.dot(h.astype(jnp.bfloat16), w4_ref[...],
                     preferred_element_type=jnp.float32) + b[3:4, :]
    out_ref[...] = jax.nn.sigmoid(logits).astype(out_ref.dtype)


def pack_params(params):
    """One-time layout plumbing: pad weights to aligned shapes (bf16), pack biases (f32)."""
    def pad_w(w, rows, cols):
        buf = jnp.zeros((rows, cols), jnp.float32)
        buf = buf.at[: w.shape[0], : w.shape[1]].set(w)
        return buf.astype(jnp.bfloat16)

    w1 = pad_w(params["W1"], F_PAD, H1_PAD)
    w2 = pad_w(params["W2"], H1_PAD, H2_PAD)
    w3 = pad_w(params["W3"], H2_PAD, H3_PAD)
    w4 = pad_w(params["W4"], H3_PAD, OUT_PAD)

    b = jnp.zeros((8, 128), jnp.float32)
    b = b.at[0, :H1].set(params["b1"].reshape(-1))
    b = b.at[1, :H2].set(params["b2"].reshape(-1))
    b = b.at[2, :H3].set(params["b3"].reshape(-1))
    b = b.at[3, :OUT].set(params["b4"].reshape(-1))
    return w1, w2, w3, w4, b


@partial(jax.jit, static_argnames=("max_tile",))
def action_conditioned_ff(x, packed_params, *, max_tile=256):
    """x: [B, 6] float32. packed_params: output of pack_params(). Returns [B, 1] float32."""
    B = x.shape[0]
    w1, w2, w3, w4, b = packed_params

    # Batch tile: 256 (multiple of 256 for v6e/v7x MXU, of 128 for v5e), shrunk for tiny B.
    tb = min(max_tile, _round_up(B, 8))
    b_pad = _round_up(B, tb)

    # Pad batch + feature dims, cast matmul operand to bf16 (halves the only B-scaling DMA).
    xp = jnp.zeros((b_pad, F_PAD), jnp.float32)
    xp = xp.at[:B, :F_IN].set(x).astype(jnp.bfloat16)

    out = pl.pallas_call(
        _mlp_kernel,
        out_shape=jax.ShapeDtypeStruct((b_pad, OUT_PAD), jnp.float32),
        grid=(b_pad // tb,),
        in_specs=[
            pl.BlockSpec((tb, F_PAD), lambda i: (i, 0)),        # x: streamed per tile
            pl.BlockSpec((F_PAD, H1_PAD), lambda i: (0, 0)),    # W1: VMEM-resident
            pl.BlockSpec((H1_PAD, H2_PAD), lambda i: (0, 0)),   # W2
            pl.BlockSpec((H2_PAD, H3_PAD), lambda i: (0, 0)),   # W3
            pl.BlockSpec((H3_PAD, OUT_PAD), lambda i: (0, 0)),  # W4
            pl.BlockSpec((8, 128), lambda i: (0, 0)),           # packed biases
        ],
        out_specs=pl.BlockSpec((tb, OUT_PAD), lambda i: (i, 0)),  # lane-dense output block
        compiler_params=pltpu.CompilerParams(
            dimension_semantics=("parallel",)),                   # megacore on v7x
    )(xp, w1, w2, w3, w4, b)

    return out[:B, :OUT]


def init_params(key):
    """PyTorch nn.Linear default init: U(-1/sqrt(fan_in), 1/sqrt(fan_in)). W stored [in, out]."""
    sizes = [(F_IN, H1), (H1, H2), (H2, H3), (H3, OUT)]
    params = {}
    for i, (fan_in, fan_out) in enumerate(sizes, start=1):
        key, kw, kb = jax.random.split(key, 3)
        bound = 1.0 / jnp.sqrt(jnp.float32(fan_in))
        params[f"W{i}"] = jax.random.uniform(
            kw, (fan_in, fan_out), jnp.float32, minval=-bound, maxval=bound)
        params[f"b{i}"] = jax.random.uniform(
            kb, (fan_out,), jnp.float32, minval=-bound, maxval=bound)
    return params


def reference_forward_f32(x, params):
    """Pure-f32 reference matching the PyTorch module semantics."""
    h = x
    for i in range(1, 4):
        h = jnp.maximum(h @ params[f"W{i}"] + params[f"b{i}"], 0.0)
    return jax.nn.sigmoid(h @ params["W4"] + params["b4"])


def reference_forward_bf16(x, params):
    """Reference mirroring the kernel's numerics: bf16 matmul operands, f32 accumulate."""
    h = x
    for i in range(1, 4):
        h = jnp.dot(h.astype(jnp.bfloat16), params[f"W{i}"].astype(jnp.bfloat16),
                    preferred_element_type=jnp.float32) + params[f"b{i}"]
        h = jnp.maximum(h, 0.0)
    logits = jnp.dot(h.astype(jnp.bfloat16), params["W4"].astype(jnp.bfloat16),
                     preferred_element_type=jnp.float32) + params["b4"]
    return jax.nn.sigmoid(logits)


if __name__ == "__main__":
    key = jax.random.PRNGKey(0)
    key, kx = jax.random.split(key)

    params = init_params(key)
    packed = pack_params(params)

    # Small batch (single tile) and a multi-tile batch (exercises the grid / pipelining).
    for B in (8, 512):
        kx, sub = jax.random.split(kx)
        x = jax.random.normal(sub, (B, F_IN), dtype=jnp.float32)

        out = jax.block_until_ready(action_conditioned_ff(x, packed))
        assert out.shape == (B, 1)

        ref_bf16 = reference_forward_bf16(x, params)
        ref_f32 = reference_forward_f32(x, params)
        assert jnp.allclose(out, ref_bf16, atol=1e-4), "mismatch vs bf16-mirrored reference"
        assert jnp.allclose(out, ref_f32, atol=3e-2), "mismatch vs f32 reference"

    print("KERNEL_OK")
</pallas_src>

<mosaic_0001>
module attributes {stable_mosaic.version = 11 : i64} {
  func.func @_mlp_kernel(%arg0: i32, %arg1: memref<8x8xbf16, #tpu.memory_space<vmem>>, %arg2: memref<8x128xbf16, #tpu.memory_space<vmem>>, %arg3: memref<128x128xbf16, #tpu.memory_space<vmem>>, %arg4: memref<128x128xbf16, #tpu.memory_space<vmem>>, %arg5: memref<128x128xbf16, #tpu.memory_space<vmem>>, %arg6: memref<8x128xf32, #tpu.memory_space<vmem>>, %arg7: memref<8x128xf32, #tpu.memory_space<vmem>>) attributes {dimension_semantics = [#tpu.dimension_semantics<parallel>], iteration_bounds = array<i64: 1>, scalar_prefetch = 0 : i64, scratch_operands = 0 : i64, tpu.core_type = #tpu.core_type<tc>, window_params = [{transform_indices = @transform_0, window_bounds = array<i64: 8, 8>}, {pipeline_mode = #tpu.pipeline_mode<synchronous>, transform_indices = @transform_1, window_bounds = array<i64: 8, 128>}, {pipeline_mode = #tpu.pipeline_mode<synchronous>, transform_indices = @transform_2, window_bounds = array<i64: 128, 128>}, {pipeline_mode = #tpu.pipeline_mode<synchronous>, transform_indices = @transform_3, window_bounds = array<i64: 128, 128>}, {pipeline_mode = #tpu.pipeline_mode<synchronous>, transform_indices = @transform_4, window_bounds = array<i64: 128, 128>}, {pipeline_mode = #tpu.pipeline_mode<synchronous>, transform_indices = @transform_5, window_bounds = array<i64: 8, 128>}, {transform_indices = @transform_6, window_bounds = array<i64: 8, 128>}]} {
    %c0 = arith.constant 0 : index
    %c0_0 = arith.constant 0 : index
    %0 = vector.load %arg1[%c0, %c0_0] : memref<8x8xbf16, #tpu.memory_space<vmem>>, vector<8x8xbf16>
    %c0_1 = arith.constant 0 : index
    %c0_2 = arith.constant 0 : index
    %1 = vector.load %arg6[%c0_1, %c0_2] : memref<8x128xf32, #tpu.memory_space<vmem>>, vector<8x128xf32>
    %c0_3 = arith.constant 0 : index
    %c0_4 = arith.constant 0 : index
    %2 = vector.load %arg2[%c0_3, %c0_4] : memref<8x128xbf16, #tpu.memory_space<vmem>>, vector<8x128xbf16>
    %cst = arith.constant dense<0.000000e+00> : vector<8x128xf32>
    %3 = tpu.matmul %0, %2, %cst {dimension_numbers = #tpu.dot_dimension_numbers<[1], [0], [0], [1], [0, 0, 1, 1], [], []>} : vector<8x8xbf16>, vector<8x128xbf16>, vector<8x128xf32> -> vector<8x128xf32>
    %4 = vector.extract_strided_slice %1 {offsets = [0, 0], sizes = [1, 128], strides = [1, 1]} : vector<8x128xf32> to vector<1x128xf32>
    %5 = vector.broadcast %4 : vector<1x128xf32> to vector<8x128xf32>
    %6 = arith.addf %3, %5 : vector<8x128xf32>
    %cst_5 = arith.constant 0.000000e+00 : f32
    %7 = vector.broadcast %cst_5 : f32 to vector<8x128xf32>
    %8 = arith.maximumf %6, %7 : vector<8x128xf32>
    %9 = arith.truncf %8 : vector<8x128xf32> to vector<8x128xbf16>
    %c0_6 = arith.constant 0 : index
    %c0_7 = arith.constant 0 : index
    %10 = vector.load %arg3[%c0_6, %c0_7] : memref<128x128xbf16, #tpu.memory_space<vmem>>, vector<128x128xbf16>
    %cst_8 = arith.constant dense<0.000000e+00> : vector<8x128xf32>
    %11 = tpu.matmul %9, %10, %cst_8 {dimension_numbers = #tpu.dot_dimension_numbers<[1], [0], [0], [1], [0, 0, 1, 1], [], []>} : vector<8x128xbf16>, vector<128x128xbf16>, vector<8x128xf32> -> vector<8x128xf32>
    %12 = vector.extract_strided_slice %1 {offsets = [1, 0], sizes = [1, 128], strides = [1, 1]} : vector<8x128xf32> to vector<1x128xf32>
    %13 = vector.broadcast %12 : vector<1x128xf32> to vector<8x128xf32>
    %14 = arith.addf %11, %13 : vector<8x128xf32>
    %cst_9 = arith.constant 0.000000e+00 : f32
    %15 = vector.broadcast %cst_9 : f32 to vector<8x128xf32>
    %16 = arith.maximumf %14, %15 : vector<8x128xf32>
    %17 = arith.truncf %16 : vector<8x128xf32> to vector<8x128xbf16>
    %c0_10 = arith.constant 0 : index
    %c0_11 = arith.constant 0 : index
    %18 = vector.load %arg4[%c0_10, %c0_11] : memref<128x128xbf16, #tpu.memory_space<vmem>>, vector<128x128xbf16>
    %cst_12 = arith.constant dense<0.000000e+00> : vector<8x128xf32>
    %19 = tpu.matmul %17, %18, %cst_12 {dimension_numbers = #tpu.dot_dimension_numbers<[1], [0], [0], [1], [0, 0, 1, 1], [], []>} : vector<8x128xbf16>, vector<128x128xbf16>, vector<8x128xf32> -> vector<8x128xf32>
    %20 = vector.extract_strided_slice %1 {offsets = [2, 0], sizes = [1, 128], strides = [1, 1]} : vector<8x128xf32> to vector<1x128xf32>
    %21 = vector.broadcast %20 : vector<1x128xf32> to vector<8x128xf32>
    %22 = arith.addf %19, %21 : vector<8x128xf32>
    %cst_13 = arith.constant 0.000000e+00 : f32
    %23 = vector.broadcast %cst_13 : f32 to vector<8x128xf32>
    %24 = arith.maximumf %22, %23 : vector<8x128xf32>
    %25 = arith.truncf %24 : vector<8x128xf32> to vector<8x128xbf16>
    %c0_14 = arith.constant 0 : index
    %c0_15 = arith.constant 0 : index
    %26 = vector.load %arg5[%c0_14, %c0_15] : memref<128x128xbf16, #tpu.memory_space<vmem>>, vector<128x128xbf16>
    %cst_16 = arith.constant dense<0.000000e+00> : vector<8x128xf32>
    %27 = tpu.matmul %25, %26, %cst_16 {dimension_numbers = #tpu.dot_dimension_numbers<[1], [0], [0], [1], [0, 0, 1, 1], [], []>} : vector<8x128xbf16>, vector<128x128xbf16>, vector<8x128xf32> -> vector<8x128xf32>
    %28 = vector.extract_strided_slice %1 {offsets = [3, 0], sizes = [1, 128], strides = [1, 1]} : vector<8x128xf32> to vector<1x128xf32>
    %29 = vector.broadcast %28 : vector<1x128xf32> to vector<8x128xf32>
    %30 = arith.addf %27, %29 : vector<8x128xf32>
    %31 = arith.negf %30 : vector<8x128xf32>
    %32 = math.exp %31 : vector<8x128xf32>
    %cst_17 = arith.constant 1.000000e+00 : f32
    %33 = vector.broadcast %cst_17 : f32 to vector<8x128xf32>
    %34 = arith.addf %33, %32 : vector<8x128xf32>
    %35 = arith.divf %33, %34 : vector<8x128xf32>
    %c0_18 = arith.constant 0 : index
    %c0_19 = arith.constant 0 : index
    %36 = vector.load %arg7[%c0_18, %c0_19] : memref<8x128xf32, #tpu.memory_space<vmem>>, vector<8x128xf32>
    tpu.vector_store %arg7[%c0_18, %c0_19], %35 {strides = array<i32>} : memref<8x128xf32, #tpu.memory_space<vmem>>, vector<8x128xf32>,
    return
  }
  func.func @transform_0(%arg0: i32) -> (i32, i32) {
    %c0_i32 = arith.constant 0 : i32
    %c0_i32_0 = arith.constant 0 : i32
    return %arg0, %c0_i32 : i32, i32
  }
  func.func @transform_1(%arg0: i32) -> (i32, i32) {
    %c0_i32 = arith.constant 0 : i32
    %c0_i32_0 = arith.constant 0 : i32
    %c0_i32_1 = arith.constant 0 : i32
    return %c0_i32, %c0_i32_0 : i32, i32
  }
  func.func @transform_2(%arg0: i32) -> (i32, i32) {
    %c0_i32 = arith.constant 0 : i32
    %c0_i32_0 = arith.constant 0 : i32
    %c0_i32_1 = arith.constant 0 : i32
    return %c0_i32, %c0_i32_0 : i32, i32
  }
  func.func @transform_3(%arg0: i32) -> (i32, i32) {
    %c0_i32 = arith.constant 0 : i32
    %c0_i32_0 = arith.constant 0 : i32
    %c0_i32_1 = arith.constant 0 : i32
    return %c0_i32, %c0_i32_0 : i32, i32
  }
  func.func @transform_4(%arg0: i32) -> (i32, i32) {
    %c0_i32 = arith.constant 0 : i32
    %c0_i32_0 = arith.constant 0 : i32
    %c0_i32_1 = arith.constant 0 : i32
    return %c0_i32, %c0_i32_0 : i32, i32
  }
  func.func @transform_5(%arg0: i32) -> (i32, i32) {
    %c0_i32 = arith.constant 0 : i32
    %c0_i32_0 = arith.constant 0 : i32
    %c0_i32_1 = arith.constant 0 : i32
    return %c0_i32, %c0_i32_0 : i32, i32
  }
  func.func @transform_6(%arg0: i32) -> (i32, i32) {
    %c0_i32 = arith.constant 0 : i32
    %c0_i32_0 = arith.constant 0 : i32
    return %arg0, %c0_i32 : i32, i32
  }
}

</mosaic_0001>

<llo_original>
// kernel: action_conditioned_ff.1
$region0: #{action_conditioned_ff.1}
  #allocation0 [shape = 'u32[]', space=smem, size = 0x4, offset = 0x4, fixed_abs, tag = 'smem constant byte address 0x4 - core index']
  #allocation1 [shape = 'u32[144,128]{1,0:T(1,128)}', space=vmem, size = 0x12000, scoped, tag = 'internal scratch']
  %s0 = inlined_call_operand.vmem [shape: bf16[8,8], index: 0, kind: input, shape index: {}]
  %s1 = inlined_call_operand.vmem [shape: bf16[8,128], index: 1, kind: input, shape index: {}]
  %s2 = inlined_call_operand.hbm [shape: bf16[128,128], index: 2, kind: input, shape index: {}]
  %s3 = inlined_call_operand.hbm [shape: bf16[128,128], index: 3, kind: input, shape index: {}]
  %s4 = inlined_call_operand.hbm [shape: bf16[128,128], index: 4, kind: input, shape index: {}]
  %s5 = inlined_call_operand.vmem [shape: f32[8,128], index: 5, kind: input, shape index: {}]
  %s6 = inlined_call_operand.vmem [shape: f32[8,128], index: 6, kind: output, shape index: {}]
  %s7 = sld [smem:[#allocation0]]
  $region46: #{action_conditioned_ff.1} parent=0
    _
  %s9 = ssub.s32 1, %s7
  %s10 = scalar_select 0, %s9, %s7
  $region1: #{action_conditioned_ff.1} parent=0
    #allocation2 [shape = 'u8[32768]{0}', space=vmem, size = 0x8000, scoped, tag = 'input window, operand 2, single buffered']
    #allocation3 [shape = 's32[1]{0}', space=sflag, size = 0x4, scoped, tag = 'scoped memory for action_conditioned_ff.1']
    #allocation4 [shape = 'u8[32768]{0}', space=vmem, size = 0x8000, scoped, tag = 'input window, operand 3, single buffered']
    #allocation5 [shape = 's32[1]{0}', space=sflag, size = 0x4, scoped, tag = 'scoped memory for action_conditioned_ff.1']
    #allocation6 [shape = 'u8[32768]{0}', space=vmem, size = 0x8000, scoped, tag = 'input window, operand 4, single buffered']
    %11 = vsyncpa [#allocation3], 0
    %12 = vsyncpa [#allocation5], 0
    // Predicated region
    $region2: #{action_conditioned_ff.1} parent=1 // pred_check
      _
    $region3: #{action_conditioned_ff.1} parent=1 // pred_check_branch
      %14 = sbr.rel (0) target = $region5
    $region4: #{action_conditioned_ff.1} parent=1 // pred_region
      _
    $region5: #{action_conditioned_ff.1} parent=1 // pred_fallthru
      _
    // Predicated region
    $region6: #{action_conditioned_ff.1} parent=1 // pred_check
      _
    $region7: #{action_conditioned_ff.1} parent=1 // pred_check_branch
      %16 = sbr.rel (0) target = $region9
    $region8: #{action_conditioned_ff.1} parent=1 // pred_region
      _
    $region9: #{action_conditioned_ff.1} parent=1 // pred_fallthru
      _
    // Predicated region
    $region10: #{action_conditioned_ff.1} parent=1 // pred_check
      _
    $region11: #{action_conditioned_ff.1} parent=1 // pred_check_branch
      %18 = sbr.rel (0) target = $region13
    $region12: #{action_conditioned_ff.1} parent=1 // pred_region
      %s20 = ssub.s32 1024, 1024
      %21 = vsyncadd [#allocation3], %s20
      %s22 = sshll.u32 [#allocation2], 4
      %s23 = int_to_ptr.vmem [resolvable:$true] %s22
      %28 = dma.hbm_to_vmem [thread:$0]  %s2, 1024, %s23, [#allocation3], 64, 64, 4
    $region13: #{action_conditioned_ff.1} parent=1 // pred_fallthru
      _
    // Predicated region
    $region14: #{action_conditioned_ff.1} parent=1 // pred_check
      _
    $region15: #{action_conditioned_ff.1} parent=1 // pred_check_branch
      %30 = sbr.rel (0) target = $region17
    $region16: #{action_conditioned_ff.1} parent=1 // pred_region
      %s32 = ssub.s32 1024, 1024
      %33 = vsyncadd [#allocation5], %s32
      %s34 = sshll.u32 [#allocation4], 4
      %s35 = int_to_ptr.vmem [resolvable:$true] %s34
      %40 = dma.hbm_to_vmem [thread:$0]  %s3, 1024, %s35, [#allocation5], 64, 64, 4
    $region17: #{action_conditioned_ff.1} parent=1 // pred_fallthru
      _
    // Predicated region
    $region18: #{action_conditioned_ff.1} parent=1 // pred_check
      _
    $region19: #{action_conditioned_ff.1} parent=1 // pred_check_branch
      %42 = sbr.rel (0) target = $region21
    $region20: #{action_conditioned_ff.1} parent=1 // pred_region
      %s44 = ssub.s32 1024, 1024
      %45 = vsyncadd [#allocation5], %s44
      %s46 = sshll.u32 [#allocation6], 4
      %s47 = int_to_ptr.vmem [resolvable:$true] %s46
      %52 = dma.hbm_to_vmem [thread:$0]  %s4, 1024, %s47, [#allocation5], 64, 64, 4
    $region21: #{action_conditioned_ff.1} parent=1 // pred_fallthru
      _
    // Predicated region
    $region22: #{action_conditioned_ff.1} parent=1 // pred_check
      _
    $region23: #{action_conditioned_ff.1} parent=1 // pred_check_branch
      %54 = sbr.rel (0) target = $region25
    $region24: #{action_conditioned_ff.1} parent=1 // pred_region
      _
    $region25: #{action_conditioned_ff.1} parent=1 // pred_fallthru
      _
    // Predicated region
    $region26: #{action_conditioned_ff.1} parent=1 // pred_check
      _
    $region27: #{action_conditioned_ff.1} parent=1 // pred_check_branch
      %56 = sbr.rel (0) target = $region29
    $region28: #{action_conditioned_ff.1} parent=1 // pred_region
      %57 = dma.done [#allocation3], 1024
    $region29: #{action_conditioned_ff.1} parent=1 // pred_fallthru
      _
    // Predicated region
    $region30: #{action_conditioned_ff.1} parent=1 // pred_check
      _
    $region31: #{action_conditioned_ff.1} parent=1 // pred_check_branch
      %59 = sbr.rel (0) target = $region33
    $region32: #{action_conditioned_ff.1} parent=1 // pred_region
      %60 = dma.done [#allocation5], 1024
    $region33: #{action_conditioned_ff.1} parent=1 // pred_fallthru
      _
    // Predicated region
    $region34: #{action_conditioned_ff.1} parent=1 // pred_check
      _
    $region35: #{action_conditioned_ff.1} parent=1 // pred_check_branch
      %62 = sbr.rel (0) target = $region37
    $region36: #{action_conditioned_ff.1} parent=1 // pred_region
      %63 = dma.done [#allocation5], 1024
    $region37: #{action_conditioned_ff.1} parent=1 // pred_fallthru
      _
    %v65 = vld [vmem:[%s0] sm:$0xf]
    %v66 = vld [vmem:[%s5] sm:$0xff]
    %v67 = vld [vmem:[%s1] sm:$0xf]
    %v68 = vlaneseq
    %v69 = vshrl.u32 %v68, 7
    %v70 = vsub.s32 0, %v69
    %v71 = vrot.slane %v66, %v70
    %vm72 = vcmask 64512
    %v74 = vsel %vm72, %v65, 0
    %vm76 = vcmask 1043456
    %v78 = vsel %vm76, %v67, 0
    %80 = vmatprep.subr.bf16.mxu0 0
    %81 = vmatpush1.bf16.msra.mxu0 %v78
    %82 = vmatprep.subr.bf16.mxu0 0
    %83 = vmatpush1.bf16.msra.mxu0 0
    %84 = vmatprep.subr.bf16.mxu0 0
    %85 = vmatpush1.bf16.msra.mxu0 0
    %86 = vmatprep.subr.bf16.mxu0 0
    %87 = vmatpush1.bf16.msra.mxu0 0
    %88 = vmatprep.subr.bf16.mxu0 0
    %89 = vmatpush1.bf16.msra.mxu0 0
    %90 = vmatprep.subr.bf16.mxu0 0
    %91 = vmatpush1.bf16.msra.mxu0 0
    %92 = vmatprep.subr.bf16.mxu0 0
    %93 = vmatpush1.bf16.msra.mxu0 0
    %94 = vmatprep.subr.bf16.mxu0 0
    %95 = vmatpush1.bf16.msra.mxu0 0
    %96 = vmatprep.subr.bf16.mxu0 0
    %97 = vmatpush1.bf16.msra.mxu0 0
    %98 = vmatprep.subr.bf16.mxu0 0
    %99 = vmatpush1.bf16.msra.mxu0 0
    %100 = vmatprep.subr.bf16.mxu0 0
    %101 = vmatpush1.bf16.msra.mxu0 0
    %102 = vmatprep.subr.bf16.mxu0 0
    %103 = vmatpush1.bf16.msra.mxu0 0
    %104 = vmatprep.subr.bf16.mxu0 0
    %105 = vmatpush1.bf16.msra.mxu0 0
    %106 = vmatprep.subr.bf16.mxu0 0
    %107 = vmatpush1.bf16.msra.mxu0 0
    %108 = vmatprep.subr.bf16.mxu0 0
    %109 = vmatpush1.bf16.msra.mxu0 0
    %110 = vmatprep.subr.bf16.mxu0 0
    %111 = vmatpush1.bf16.msra.mxu0 0
    %112 = vmatprep.mubr.bf16.mxu0 0
    %113 = vmatmul.mubr.bf16.gmra.mrb[0].mxu0 %v74
    %v114 = vpop.f32.mrb[0].mxu0
    %v115 = vadd.f32 %v71, %v114
    %v116 = vpop.f32.mrb[0].mxu0
    %v117 = vpop.f32.mrb[0].mxu0
    %v118 = vpop.f32.mrb[0].mxu0
    %119 = vdwg.mxu0
    %v120 = vmax.f32 %v115, 0.0
    %v121 = vpack.c.bf16 %v120, %v120
    %v122 = vld [vmem:[#allocation2] sm:$0xf]
    %v123 = vld [vmem:[#allocation2 + $0x4] sm:$0xf]
    %v124 = vld [vmem:[#allocation2 + $0x8] sm:$0xf]
    %v125 = vld [vmem:[#allocation2 + $0xc] sm:$0xf]
    %v126 = vld [vmem:[#allocation2 + $0x10] sm:$0xf]
    %v127 = vld [vmem:[#allocation2 + $0x14] sm:$0xf]
    %v128 = vld [vmem:[#allocation2 + $0x18] sm:$0xf]
    %v129 = vld [vmem:[#allocation2 + $0x1c] sm:$0xf]
    %v130 = vld [vmem:[#allocation2 + $0x20] sm:$0xf]
    %v131 = vld [vmem:[#allocation2 + $0x24] sm:$0xf]
    %v132 = vld [vmem:[#allocation2 + $0x28] sm:$0xf]
    %v133 = vld [vmem:[#allocation2 + $0x2c] sm:$0xf]
    %v134 = vld [vmem:[#allocation2 + $0x30] sm:$0xf]
    %v135 = vld [vmem:[#allocation2 + $0x34] sm:$0xf]
    %v136 = vld [vmem:[#allocation2 + $0x38] sm:$0xf]
    %v137 = vld [vmem:[#allocation2 + $0x3c] sm:$0xf]
    %v138 = vlaneseq
    %v139 = vshrl.u32 %v138, 7
    %v140 = vsub.s32 1, %v139
    %v141 = vrot.slane %v66, %v140
    %v158 = vunpack.c.l.b16 %v122
    %v159 = vunpack.c.l.b16 %v123
    %v160 = vunpack.c.l.b16 %v124
    %v161 = vunpack.c.l.b16 %v125
    %v162 = vunpack.c.l.b16 %v126
    %v163 = vunpack.c.l.b16 %v127
    %v164 = vunpack.c.l.b16 %v128
    %v165 = vunpack.c.l.b16 %v129
    %v166 = vunpack.c.l.b16 %v130
    %v167 = vunpack.c.l.b16 %v131
    %v168 = vunpack.c.l.b16 %v132
    %v169 = vunpack.c.l.b16 %v133
    %v170 = vunpack.c.l.b16 %v134
    %v171 = vunpack.c.l.b16 %v135
    %v172 = vunpack.c.l.b16 %v136
    %v173 = vunpack.c.l.b16 %v137
    %v174 = vpack.c.b16 %v159, %v158
    %v175 = vpack.c.b16 %v161, %v160
    %v176 = vpack.c.b16 %v163, %v162
    %v177 = vpack.c.b16 %v165, %v164
    %v178 = vpack.c.b16 %v167, %v166
    %v179 = vpack.c.b16 %v169, %v168
    %v180 = vpack.c.b16 %v171, %v170
    %v181 = vpack.c.b16 %v173, %v172
    %190 = vmatprep.subr.bf16.mxu0 0
    %191 = vmatpush1.bf16.msra.mxu0 %v174
    %192 = vmatprep.subr.bf16.mxu0 0
    %193 = vmatpush1.bf16.msra.mxu0 %v175
    %194 = vmatprep.subr.bf16.mxu0 0
    %195 = vmatpush1.bf16.msra.mxu0 %v176
    %196 = vmatprep.subr.bf16.mxu0 0
    %197 = vmatpush1.bf16.msra.mxu0 %v177
    %198 = vmatprep.subr.bf16.mxu0 0
    %199 = vmatpush1.bf16.msra.mxu0 %v178
    %200 = vmatprep.subr.bf16.mxu0 0
    %201 = vmatpush1.bf16.msra.mxu0 %v179
    %202 = vmatprep.subr.bf16.mxu0 0
    %203 = vmatpush1.bf16.msra.mxu0 %v180
    %204 = vmatprep.subr.bf16.mxu0 0
    %205 = vmatpush1.bf16.msra.mxu0 %v181
    %206 = vmatprep.subr.bf16.mxu0 0
    %207 = vmatpush1.bf16.msra.mxu0 0
    %208 = vmatprep.subr.bf16.mxu0 0
    %209 = vmatpush1.bf16.msra.mxu0 0
    %210 = vmatprep.subr.bf16.mxu0 0
    %211 = vmatpush1.bf16.msra.mxu0 0
    %212 = vmatprep.subr.bf16.mxu0 0
    %213 = vmatpush1.bf16.msra.mxu0 0
    %214 = vmatprep.subr.bf16.mxu0 0
    %215 = vmatpush1.bf16.msra.mxu0 0
    %216 = vmatprep.subr.bf16.mxu0 0
    %217 = vmatpush1.bf16.msra.mxu0 0
    %218 = vmatprep.subr.bf16.mxu0 0
    %219 = vmatpush1.bf16.msra.mxu0 0
    %220 = vmatprep.subr.bf16.mxu0 0
    %221 = vmatpush1.bf16.msra.mxu0 0
    %222 = vmatprep.mubr.bf16.mxu0 0
    %223 = vmatmul.mubr.bf16.gmra.mrb[0].mxu0 %v121
    %v224 = vpop.f32.mrb[0].mxu0
    %v225 = vadd.f32 %v141, %v224
    %v226 = vpop.f32.mrb[0].mxu0
    %v227 = vpop.f32.mrb[0].mxu0
    %v228 = vpop.f32.mrb[0].mxu0
    %229 = vdwg.mxu0
    %v230 = vmax.f32 %v225, 0.0
    %v231 = vpack.c.bf16 %v230, %v230
    %v232 = vld [vmem:[#allocation4] sm:$0xf]
    %v233 = vld [vmem:[#allocation4 + $0x4] sm:$0xf]
    %v234 = vld [vmem:[#allocation4 + $0x8] sm:$0xf]
    %v235 = vld [vmem:[#allocation4 + $0xc] sm:$0xf]
    %v236 = vld [vmem:[#allocation4 + $0x10] sm:$0xf]
    %v237 = vld [vmem:[#allocation4 + $0x14] sm:$0xf]
    %v238 = vld [vmem:[#allocation4 + $0x18] sm:$0xf]
    %v239 = vld [vmem:[#allocation4 + $0x1c] sm:$0xf]
    %v240 = vld [vmem:[#allocation4 + $0x20] sm:$0xf]
    %v241 = vld [vmem:[#allocation4 + $0x24] sm:$0xf]
    %v242 = vld [vmem:[#allocation4 + $0x28] sm:$0xf]
    %v243 = vld [vmem:[#allocation4 + $0x2c] sm:$0xf]
    %v244 = vld [vmem:[#allocation4 + $0x30] sm:$0xf]
    %v245 = vld [vmem:[#allocation4 + $0x34] sm:$0xf]
    %v246 = vld [vmem:[#allocation4 + $0x38] sm:$0xf]
    %v247 = vld [vmem:[#allocation4 + $0x3c] sm:$0xf]
    %v248 = vlaneseq
    %v249 = vshrl.u32 %v248, 7
    %v250 = vsub.s32 2, %v249
    %v251 = vrot.slane %v66, %v250
    %v268 = vunpack.c.l.b16 %v232
    %v269 = vunpack.c.l.b16 %v233
    %v270 = vunpack.c.l.b16 %v234
    %v271 = vunpack.c.l.b16 %v235
    %v272 = vunpack.c.l.b16 %v236
    %v273 = vunpack.c.l.b16 %v237
    %v274 = vunpack.c.l.b16 %v238
    %v275 = vunpack.c.l.b16 %v239
    %v276 = vunpack.c.l.b16 %v240
    %v277 = vunpack.c.l.b16 %v241
    %v278 = vunpack.c.l.b16 %v242
    %v279 = vunpack.c.l.b16 %v243
    %v280 = vunpack.c.l.b16 %v244
    %v281 = vunpack.c.l.b16 %v245
    %v282 = vunpack.c.l.b16 %v246
    %v283 = vunpack.c.l.b16 %v247
    %v284 = vpack.c.b16 %v269, %v268
    %v285 = vpack.c.b16 %v271, %v270
    %v286 = vpack.c.b16 %v273, %v272
    %v287 = vpack.c.b16 %v275, %v274
    %v288 = vpack.c.b16 %v277, %v276
    %v289 = vpack.c.b16 %v279, %v278
    %v290 = vpack.c.b16 %v281, %v280
    %v291 = vpack.c.b16 %v283, %v282
    %300 = vmatprep.subr.bf16.mxu0 0
    %301 = vmatpush1.bf16.msra.mxu0 %v284
    %302 = vmatprep.subr.bf16.mxu0 0
    %303 = vmatpush1.bf16.msra.mxu0 %v285
    %304 = vmatprep.subr.bf16.mxu0 0
    %305 = vmatpush1.bf16.msra.mxu0 %v286
    %306 = vmatprep.subr.bf16.mxu0 0
    %307 = vmatpush1.bf16.msra.mxu0 %v287
    %308 = vmatprep.subr.bf16.mxu0 0
    %309 = vmatpush1.bf16.msra.mxu0 %v288
    %310 = vmatprep.subr.bf16.mxu0 0
    %311 = vmatpush1.bf16.msra.mxu0 %v289
    %312 = vmatprep.subr.bf16.mxu0 0
    %313 = vmatpush1.bf16.msra.mxu0 %v290
    %314 = vmatprep.subr.bf16.mxu0 0
    %315 = vmatpush1.bf16.msra.mxu0 %v291
    %316 = vmatprep.subr.bf16.mxu0 0
    %317 = vmatpush1.bf16.msra.mxu0 0
    %318 = vmatprep.subr.bf16.mxu0 0
    %319 = vmatpush1.bf16.msra.mxu0 0
    %320 = vmatprep.subr.bf16.mxu0 0
    %321 = vmatpush1.bf16.msra.mxu0 0
    %322 = vmatprep.subr.bf16.mxu0 0
    %323 = vmatpush1.bf16.msra.mxu0 0
    %324 = vmatprep.subr.bf16.mxu0 0
    %325 = vmatpush1.bf16.msra.mxu0 0
    %326 = vmatprep.subr.bf16.mxu0 0
    %327 = vmatpush1.bf16.msra.mxu0 0
    %328 = vmatprep.subr.bf16.mxu0 0
    %329 = vmatpush1.bf16.msra.mxu0 0
    %330 = vmatprep.subr.bf16.mxu0 0
    %331 = vmatpush1.bf16.msra.mxu0 0
    %332 = vmatprep.mubr.bf16.mxu0 0
    %333 = vmatmul.mubr.bf16.gmra.mrb[0].mxu0 %v231
    %v334 = vpop.f32.mrb[0].mxu0
    %v335 = vadd.f32 %v251, %v334
    %v336 = vpop.f32.mrb[0].mxu0
    %v337 = vpop.f32.mrb[0].mxu0
    %v338 = vpop.f32.mrb[0].mxu0
    %339 = vdwg.mxu0
    %v340 = vmax.f32 %v335, 0.0
    %v341 = vpack.c.bf16 %v340, %v340
    %v342 = vld [vmem:[#allocation6] sm:$0xf]
    %v343 = vld [vmem:[#allocation6 + $0x4] sm:$0xf]
    %v344 = vld [vmem:[#allocation6 + $0x8] sm:$0xf]
    %v345 = vld [vmem:[#allocation6 + $0xc] sm:$0xf]
    %v346 = vld [vmem:[#allocation6 + $0x10] sm:$0xf]
    %v347 = vld [vmem:[#allocation6 + $0x14] sm:$0xf]
    %v348 = vld [vmem:[#allocation6 + $0x18] sm:$0xf]
    %v349 = vld [vmem:[#allocation6 + $0x1c] sm:$0xf]
    %v350 = vld [vmem:[#allocation6 + $0x20] sm:$0xf]
    %v351 = vld [vmem:[#allocation6 + $0x24] sm:$0xf]
    %v352 = vld [vmem:[#allocation6 + $0x28] sm:$0xf]
    %v353 = vld [vmem:[#allocation6 + $0x2c] sm:$0xf]
    %v354 = vld [vmem:[#allocation6 + $0x30] sm:$0xf]
    %v355 = vld [vmem:[#allocation6 + $0x34] sm:$0xf]
    %v356 = vld [vmem:[#allocation6 + $0x38] sm:$0xf]
    %v357 = vld [vmem:[#allocation6 + $0x3c] sm:$0xf]
    %v358 = vlaneseq
    %v359 = vshrl.u32 %v358, 7
    %v360 = vsub.s32 3, %v359
    %v361 = vrot.slane %v66, %v360
    %v378 = vunpack.c.l.b16 %v342
    %v379 = vunpack.c.l.b16 %v343
    %v380 = vunpack.c.l.b16 %v344
    %v381 = vunpack.c.l.b16 %v345
    %v382 = vunpack.c.l.b16 %v346
    %v383 = vunpack.c.l.b16 %v347
    %v384 = vunpack.c.l.b16 %v348
    %v385 = vunpack.c.l.b16 %v349
    %v386 = vunpack.c.l.b16 %v350
    %v387 = vunpack.c.l.b16 %v351
    %v388 = vunpack.c.l.b16 %v352
    %v389 = vunpack.c.l.b16 %v353
    %v390 = vunpack.c.l.b16 %v354
    %v391 = vunpack.c.l.b16 %v355
    %v392 = vunpack.c.l.b16 %v356
    %v393 = vunpack.c.l.b16 %v357
    %v394 = vpack.c.b16 %v379, %v378
    %v395 = vpack.c.b16 %v381, %v380
    %v396 = vpack.c.b16 %v383, %v382
    %v397 = vpack.c.b16 %v385, %v384
    %v398 = vpack.c.b16 %v387, %v386
    %v399 = vpack.c.b16 %v389, %v388
    %v400 = vpack.c.b16 %v391, %v390
    %v401 = vpack.c.b16 %v393, %v392
    %410 = vmatprep.subr.bf16.mxu0 0
    %411 = vmatpush1.bf16.msra.mxu0 %v394
    %412 = vmatprep.subr.bf16.mxu0 0
    %413 = vmatpush1.bf16.msra.mxu0 %v395
    %414 = vmatprep.subr.bf16.mxu0 0
    %415 = vmatpush1.bf16.msra.mxu0 %v396
    %416 = vmatprep.subr.bf16.mxu0 0
    %417 = vmatpush1.bf16.msra.mxu0 %v397
    %418 = vmatprep.subr.bf16.mxu0 0
    %419 = vmatpush1.bf16.msra.mxu0 %v398
    %420 = vmatprep.subr.bf16.mxu0 0
    %421 = vmatpush1.bf16.msra.mxu0 %v399
    %422 = vmatprep.subr.bf16.mxu0 0
    %423 = vmatpush1.bf16.msra.mxu0 %v400
    %424 = vmatprep.subr.bf16.mxu0 0
    %425 = vmatpush1.bf16.msra.mxu0 %v401
    %426 = vmatprep.subr.bf16.mxu0 0
    %427 = vmatpush1.bf16.msra.mxu0 0
    %428 = vmatprep.subr.bf16.mxu0 0
    %429 = vmatpush1.bf16.msra.mxu0 0
    %430 = vmatprep.subr.bf16.mxu0 0
    %431 = vmatpush1.bf16.msra.mxu0 0
    %432 = vmatprep.subr.bf16.mxu0 0
    %433 = vmatpush1.bf16.msra.mxu0 0
    %434 = vmatprep.subr.bf16.mxu0 0
    %435 = vmatpush1.bf16.msra.mxu0 0
    %436 = vmatprep.subr.bf16.mxu0 0
    %437 = vmatpush1.bf16.msra.mxu0 0
    %438 = vmatprep.subr.bf16.mxu0 0
    %439 = vmatpush1.bf16.msra.mxu0 0
    %440 = vmatprep.subr.bf16.mxu0 0
    %441 = vmatpush1.bf16.msra.mxu0 0
    %442 = vmatprep.mubr.bf16.mxu0 0
    %443 = vmatmul.mubr.bf16.gmra.mrb[0].mxu0 %v341
    %v444 = vpop.f32.mrb[0].mxu0
    %v445 = vadd.f32 %v361, %v444
    %v446 = vpop.f32.mrb[0].mxu0
    %v447 = vpop.f32.mrb[0].mxu0
    %v448 = vpop.f32.mrb[0].mxu0
    %449 = vdwg.mxu0
    %v450 = vxor.u32 %v445, 2147483648
    %v451 = vmul.f32 %v450, 1.442695
    %v452 = vpow.pop %v451
    %v453 = vadd.f32 %v452, 1.0
    %v454 = vrcp.pop %v453
    %v455 = vmul.f32 1.0, %v454
    %456 = vst [vmem:[%s6] sm:$0xff] %v455
    // Predicated region
    $region38: #{action_conditioned_ff.1} parent=1 // pred_check
      _
    $region39: #{action_conditioned_ff.1} parent=1 // pred_check_branch
      %458 = sbr.rel (0) target = $region41
    $region40: #{action_conditioned_ff.1} parent=1 // pred_region
      _
    $region41: #{action_conditioned_ff.1} parent=1 // pred_fallthru
      _
    // Predicated region
    $region42: #{action_conditioned_ff.1} parent=1 // pred_check
      _
    $region43: #{action_conditioned_ff.1} parent=1 // pred_check_branch
      %460 = sbr.rel (0) target = $region45
    $region44: #{action_conditioned_ff.1} parent=1 // pred_region
      _
    $region45: #{action_conditioned_ff.1} parent=1 // pred_fallthru
      _
    %461 = vsyncpa [#allocation3], 1
    %462 = vsyncpa [#allocation5], 1

</llo_original>
